<compile_context>
chip_gen: v6e
topology: v6e:2x2x1
jax: 0.10.0
libtpu: 0.0.40
codegen_flags: <defaults>
</compile_context>

<pallas_src>
import math
from collections import Counter
from functools import partial

import jax
import jax.numpy as jnp
import numpy as np
from jax.experimental import pallas as pl
from jax.experimental.pallas import tpu as pltpu

STOP_TOKEN = 1
_LANE = 128
_SUBLANE = 8
_TARGET_STEP_BYTES = 4 * 1024 * 1024     # pb+sel bytes moved per grid step
_VMEM_INPUT_BUDGET = 12 * 1024 * 1024    # double-buffered pb+sel cap (fits v5e scoped VMEM)
_VMEM_LIMIT_BYTES = 32 * 1024 * 1024     # explicit scoped limit, safe on v5e/v6e/v7x


def _round_up(x, m):
    return ((x + m - 1) // m) * m


# ----------------------------- Pallas kernel --------------------------------
def _make_loss_rl_kernel(batch, stc_length, block_rows, lanes):
    def kernel(pb_ref, sel_ref, adv_ref, out_ref):
        pid = pl.program_id(0)

        col = jax.lax.broadcasted_iota(jnp.int32, (block_rows, lanes), 1)
        row = (
            jax.lax.broadcasted_iota(jnp.int32, (block_rows, lanes), 0)
            + pid * block_rows
        )

        # Index of the first stop token per row (= lanes if none), in int32.
        # The inclusive running "stop after token==1" mask is col <= first_stop.
        stop = sel_ref[...] == STOP_TOKEN
        first_stop = jnp.min(
            jnp.where(stop, col, lanes), axis=-1, keepdims=True
        )  # (block_rows, 1) i32

        mask = jnp.logical_and(
            col <= first_stop,
            jnp.logical_and(col < stc_length, row < batch),
        )

        # Separable form: lane-reduce the masked -pb first, then a (block_rows,1)
        # multiply with adv.  where-selects (not multiplies) keep NaN/Inf garbage
        # from the partial last block out of the accumulators.
        neg_pb = jnp.where(mask, -pb_ref[...], 0.0)
        row_sum = jnp.sum(neg_pb, axis=-1, keepdims=True)  # (block_rows, 1)

        row_valid = (
            jax.lax.broadcasted_iota(jnp.int32, (block_rows, 1), 0)
            + pid * block_rows
        ) < batch
        adv = jnp.where(row_valid, adv_ref[...], 0.0)

        ls_part = jnp.sum(row_sum * adv)
        cnt_part = jnp.sum(mask.astype(jnp.float32))

        # Per-block partials into a lane-dense (8,128) output tile:
        # [0,0] = ls partial, [0,1] = cnt partial, rest zero.
        r = jax.lax.broadcasted_iota(jnp.int32, (_SUBLANE, _LANE), 0)
        c = jax.lax.broadcasted_iota(jnp.int32, (_SUBLANE, _LANE), 1)
        slab = jnp.where(
            jnp.logical_and(r == 0, c == 0),
            ls_part,
            jnp.where(jnp.logical_and(r == 0, c == 1), cnt_part, 0.0),
        )
        out_ref[...] = slab

    return kernel


@partial(jax.jit, static_argnames=("stc_length", "block_rows"))
def loss_rl_pallas(pb, sel, adv, *, stc_length, block_rows=None):
    """pb: (B, L) f32 log-probs, sel: (B, L) i32 tokens, adv: (B, 1) f32 -> scalar."""
    pb = pb.astype(jnp.float32)
    sel = sel.astype(jnp.int32)
    adv = adv.astype(jnp.float32)
    batch, seq = pb.shape
    stc_length = int(stc_length)
    assert 1 <= stc_length <= seq

    # Only DMA columns that can contribute: trim to round_up(stc_length, 128),
    # or take the full (possibly non-128-multiple) sequence dim.
    if _round_up(stc_length, _LANE) >= seq:
        lanes = seq
    else:
        lanes = _round_up(stc_length, _LANE)

    bytes_per_row = (4 + 4) * lanes  # pb f32 + sel i32
    if block_rows is None:
        rows_target = max(_SUBLANE, _TARGET_STEP_BYTES // bytes_per_row)
        rows_budget = max(_SUBLANE, _VMEM_INPUT_BUDGET // (2 * bytes_per_row))
        block_rows = min(rows_target, rows_budget, _round_up(batch, _SUBLANE))
    block_rows = max(_SUBLANE, (int(block_rows) // _SUBLANE) * _SUBLANE)

    num_blocks = -(-batch // block_rows)
    grid = (num_blocks,)
    kernel = _make_loss_rl_kernel(batch, stc_length, block_rows, lanes)

    partials = pl.pallas_call(
        kernel,
        out_shape=jax.ShapeDtypeStruct((num_blocks * _SUBLANE, _LANE), jnp.float32),
        grid=grid,
        in_specs=[
            pl.BlockSpec((block_rows, lanes), lambda i: (i, 0)),
            pl.BlockSpec((block_rows, lanes), lambda i: (i, 0)),
            pl.BlockSpec((block_rows, 1), lambda i: (i, 0)),
        ],
        out_specs=pl.BlockSpec((_SUBLANE, _LANE), lambda i: (i, 0)),
        compiler_params=pltpu.CompilerParams(
            dimension_semantics=("parallel",),
            vmem_limit_bytes=_VMEM_LIMIT_BYTES,
        ),
    )(pb, sel, adv)

    ls = jnp.sum(partials[:, 0])
    cnt = jnp.sum(partials[:, 1])
    return ls / cnt


# --------------------------- host-side BLEU reward ---------------------------
def _sentence_bleu(refs, cnd, max_n=4):
    # TODO(synk): the reference calls an undefined BLEU(); this is a standard
    # add-1 smoothed sentence-BLEU stand-in (host-side, no Pallas equivalent).
    if len(cnd) == 0:
        return 0.0
    log_precisions = []
    for n in range(1, max_n + 1):
        cnd_ngrams = Counter(tuple(cnd[i : i + n]) for i in range(len(cnd) - n + 1))
        max_ref = Counter()
        for r in refs:
            rc = Counter(tuple(r[i : i + n]) for i in range(len(r) - n + 1))
            for g, v in rc.items():
                max_ref[g] = max(max_ref[g], v)
        total = sum(cnd_ngrams.values())
        clipped = sum(min(c, max_ref[g]) for g, c in cnd_ngrams.items())
        log_precisions.append(math.log((clipped + 1.0) / (total + 1.0)))
    geo = math.exp(sum(log_precisions) / max_n)
    ref_len = min((len(r) for r in refs), default=0)
    bp = 1.0 if len(cnd) >= ref_len else math.exp(1.0 - ref_len / max(len(cnd), 1))
    return bp * geo


def get_bleu(out, dec_out, vocab_size):
    out = list(out)
    dec_out = list(dec_out)
    cnd = out[: out.index(STOP_TOKEN)] if STOP_TOKEN in out else out
    ref = [dec_out[: dec_out.index(STOP_TOKEN)]] if STOP_TOKEN in dec_out else [dec_out]
    return _sentence_bleu(ref, cnd)


# ------------------------------- module port ---------------------------------
class LossRL:
    """JAX/Pallas port of seq2seq_rl.rl.LossRL (stateful baseline kept in Python)."""

    def __init__(self):
        self.bl = 0.0
        self.bn = 0

    def forward(self, sel, pb, dec_out, stc_length, vocab_size):
        sel_np = np.asarray(sel)
        dec_np = np.asarray(dec_out)
        batch = sel_np.shape[0]
        bleus = np.asarray(
            [get_bleu(sel_np[i], dec_np[i], vocab_size) for i in range(batch)],
            dtype=np.float32,
        )
        adv = (bleus - self.bl).astype(np.float32).reshape(batch, 1)
        ls = loss_rl_pallas(
            jnp.asarray(pb),
            jnp.asarray(sel),
            jnp.asarray(adv),
            stc_length=int(stc_length),
        )
        bleu = float(np.average(bleus))
        self.bl = (self.bl * self.bn + bleu) / (self.bn + 1)
        self.bn += 1
        return ls


# ------------------------------ numpy reference ------------------------------
def _reference_loss(pb, sel, adv, stc_length):
    pb = np.asarray(pb, dtype=np.float64)
    sel = np.asarray(sel)
    adv = np.asarray(adv, dtype=np.float64).reshape(-1)
    batch = sel.shape[0]
    wgt = np.ones(batch, dtype=np.int64)
    ls, cnt = 0.0, 0.0
    for j in range(stc_length):
        ls += np.sum(-pb[:, j] * adv * wgt.astype(np.float64))
        cnt += np.sum(wgt)
        wgt = wgt & (sel[:, j] != STOP_TOKEN)
    return ls / cnt


if __name__ == "__main__":
    key = jax.random.PRNGKey(0)
    batch, seq, vocab = 8, 16, 32
    k1, k2, k3 = jax.random.split(key, 3)

    # sampled tokens, reference tokens, and (negative) log-probs of samples
    sel = jax.random.randint(k1, (batch, seq), 0, vocab, dtype=jnp.int32)
    dec_out = jax.random.randint(k2, (batch, seq), 0, vocab, dtype=jnp.int32)
    pb = -jax.nn.softplus(jax.random.normal(k3, (batch, seq), dtype=jnp.float32))

    loss_mod = LossRL()
    loss = loss_mod.forward(sel, pb, dec_out, seq, vocab)
    loss = jax.block_until_ready(loss)

    # correctness check 1: full module path vs numpy port of the torch loop
    bleus = np.asarray(
        [get_bleu(np.asarray(sel)[i], np.asarray(dec_out)[i], vocab) for i in range(batch)]
    )
    ref = _reference_loss(pb, sel, bleus - 0.0, seq)  # baseline was 0 on first call
    np.testing.assert_allclose(float(loss), ref, rtol=1e-5, atol=1e-6)

    # correctness check 2: multi-block grid with a partial last block, ragged batch,
    # partial stc_length (lane window trimmed / masked in-kernel, no host padding).
    k4, k5, k6 = jax.random.split(jax.random.PRNGKey(1), 3)
    b2, l2, stc2 = 20, 24, 17
    sel2 = jax.random.randint(k4, (b2, l2), 0, 4, dtype=jnp.int32)  # stop token frequent
    pb2 = -jax.nn.softplus(jax.random.normal(k5, (b2, l2), dtype=jnp.float32))
    adv2 = jax.random.normal(k6, (b2, 1), dtype=jnp.float32)
    out2 = loss_rl_pallas(pb2, sel2, adv2, stc_length=stc2, block_rows=8)
    out2 = jax.block_until_ready(out2)
    ref2 = _reference_loss(pb2, sel2, np.asarray(adv2).reshape(-1), stc2)
    np.testing.assert_allclose(float(out2), ref2, rtol=1e-5, atol=1e-6)

    # correctness check 3: sequence longer than the stc window (column trimming path)
    k7, k8, k9 = jax.random.split(jax.random.PRNGKey(2), 3)
    b3, l3, stc3 = 24, 160, 100
    sel3 = jax.random.randint(k7, (b3, l3), 0, 6, dtype=jnp.int32)
    pb3 = -jax.nn.softplus(jax.random.normal(k8, (b3, l3), dtype=jnp.float32))
    adv3 = jax.random.normal(k9, (b3, 1), dtype=jnp.float32)
    out3 = loss_rl_pallas(pb3, sel3, adv3, stc_length=stc3)
    out3 = jax.block_until_ready(out3)
    ref3 = _reference_loss(pb3, sel3, np.asarray(adv3).reshape(-1), stc3)
    np.testing.assert_allclose(float(out3), ref3, rtol=1e-5, atol=1e-6)

    print("KERNEL_OK")
</pallas_src>

<mosaic_0001>
module attributes {stable_mosaic.version = 11 : i64} {
  func.func @kernel(%arg0: i32, %arg1: memref<8x16xf32, #tpu.memory_space<vmem>>, %arg2: memref<8x16xi32, #tpu.memory_space<vmem>>, %arg3: memref<8x1xf32, #tpu.memory_space<vmem>>, %arg4: memref<8x128xf32, #tpu.memory_space<vmem>>) attributes {dimension_semantics = [#tpu.dimension_semantics<parallel>], iteration_bounds = array<i64: 1>, scalar_prefetch = 0 : i64, scratch_operands = 0 : i64, tpu.core_type = #tpu.core_type<tc>, window_params = [{transform_indices = @transform_0, window_bounds = array<i64: 8, 16>}, {transform_indices = @transform_1, window_bounds = array<i64: 8, 16>}, {transform_indices = @transform_2, window_bounds = array<i64: 8, 1>}, {transform_indices = @transform_3, window_bounds = array<i64: 8, 128>}]} {
    %0 = tpu.iota {dimensions = array<i32: 1>} : vector<8x16xi32>
    %1 = tpu.iota {dimensions = array<i32: 0>} : vector<8x16xi32>
    %c8_i32 = arith.constant 8 : i32
    %2 = arith.muli %arg0, %c8_i32 : i32
    %3 = vector.broadcast %2 : i32 to vector<8x16xi32>
    %4 = arith.addi %1, %3 : vector<8x16xi32>
    %c0 = arith.constant 0 : index
    %c0_0 = arith.constant 0 : index
    %5 = vector.load %arg2[%c0, %c0_0] : memref<8x16xi32, #tpu.memory_space<vmem>>, vector<8x16xi32>
    %c1_i32 = arith.constant 1 : i32
    %6 = vector.broadcast %c1_i32 : i32 to vector<8x16xi32>
    %7 = arith.cmpi eq, %5, %6 : vector<8x16xi32>
    %c16_i32 = arith.constant 16 : i32
    %8 = vector.broadcast %c16_i32 : i32 to vector<8x16xi32>
    %9 = arith.select %7, %0, %8 : vector<8x16xi1>, vector<8x16xi32>
    %cst = arith.constant dense<2147483647> : vector<8xi32>
    %10 = vector.multi_reduction <minsi>, %9, %cst [1] : vector<8x16xi32> to vector<8xi32>
    %11 = vector.shape_cast %10 : vector<8xi32> to vector<8x1xi32>
    %12 = vector.broadcast %11 : vector<8x1xi32> to vector<8x16xi32>
    %13 = arith.cmpi sle, %0, %12 : vector<8x16xi32>
    %c16_i32_1 = arith.constant 16 : i32
    %14 = vector.broadcast %c16_i32_1 : i32 to vector<8x16xi32>
    %15 = arith.cmpi slt, %0, %14 : vector<8x16xi32>
    %c8_i32_2 = arith.constant 8 : i32
    %16 = vector.broadcast %c8_i32_2 : i32 to vector<8x16xi32>
    %17 = arith.cmpi slt, %4, %16 : vector<8x16xi32>
    %18 = arith.andi %15, %17 : vector<8x16xi1>
    %19 = arith.andi %13, %18 : vector<8x16xi1>
    %c0_3 = arith.constant 0 : index
    %c0_4 = arith.constant 0 : index
    %20 = vector.load %arg1[%c0_3, %c0_4] : memref<8x16xf32, #tpu.memory_space<vmem>>, vector<8x16xf32>
    %cst_5 = arith.constant 0.000000e+00 : f32
    %21 = vector.broadcast %cst_5 : f32 to vector<8x16xf32>
    %22 = arith.subf %21, %20 : vector<8x16xf32>
    %cst_6 = arith.constant 0.000000e+00 : f32
    %23 = vector.broadcast %cst_6 : f32 to vector<8x16xf32>
    %24 = arith.select %19, %22, %23 : vector<8x16xi1>, vector<8x16xf32>
    %cst_7 = arith.constant dense<0.000000e+00> : vector<8xf32>
    %25 = vector.multi_reduction <add>, %24, %cst_7 [1] : vector<8x16xf32> to vector<8xf32>
    %26 = vector.shape_cast %25 : vector<8xf32> to vector<8x1xf32>
    %27 = tpu.iota {dimensions = array<i32: 0>} : vector<8x1xi32>
    %c8_i32_8 = arith.constant 8 : i32
    %28 = arith.muli %arg0, %c8_i32_8 : i32
    %29 = vector.broadcast %28 : i32 to vector<8x1xi32>
    %30 = arith.addi %27, %29 : vector<8x1xi32>
    %c8_i32_9 = arith.constant 8 : i32
    %31 = vector.broadcast %c8_i32_9 : i32 to vector<8x1xi32>
    %32 = arith.cmpi slt, %30, %31 : vector<8x1xi32>
    %c0_10 = arith.constant 0 : index
    %c0_11 = arith.constant 0 : index
    %33 = vector.load %arg3[%c0_10, %c0_11] : memref<8x1xf32, #tpu.memory_space<vmem>>, vector<8x1xf32>
    %cst_12 = arith.constant 0.000000e+00 : f32
    %34 = vector.broadcast %cst_12 : f32 to vector<8x1xf32>
    %35 = arith.select %32, %33, %34 : vector<8x1xi1>, vector<8x1xf32>
    %36 = arith.mulf %26, %35 : vector<8x1xf32>
    %37 = vector.shape_cast %36 : vector<8x1xf32> to vector<1x8x1xf32>
    %cst_13 = arith.constant dense<0.000000e+00> : vector<1xf32>
    %38 = vector.multi_reduction <add>, %37, %cst_13 [1, 2] : vector<1x8x1xf32> to vector<1xf32>
    %39 = vector.shape_cast %38 : vector<1xf32> to vector<1x1x1xf32>
    %40 = vector.extract %39[0, 0, 0] : f32 from vector<1x1x1xf32>
    %41 = arith.extui %19 : vector<8x16xi1> to vector<8x16xi32>
    %42 = arith.sitofp %41 : vector<8x16xi32> to vector<8x16xf32>
    %43 = vector.shape_cast %42 : vector<8x16xf32> to vector<1x8x16xf32>
    %cst_14 = arith.constant dense<0.000000e+00> : vector<1xf32>
    %44 = vector.multi_reduction <add>, %43, %cst_14 [1, 2] : vector<1x8x16xf32> to vector<1xf32>
    %45 = vector.shape_cast %44 : vector<1xf32> to vector<1x1x1xf32>
    %46 = vector.extract %45[0, 0, 0] : f32 from vector<1x1x1xf32>
    %47 = tpu.iota {dimensions = array<i32: 0>} : vector<8x128xi32>
    %48 = tpu.iota {dimensions = array<i32: 1>} : vector<8x128xi32>
    %c0_i32 = arith.constant 0 : i32
    %49 = vector.broadcast %c0_i32 : i32 to vector<8x128xi32>
    %50 = arith.cmpi eq, %47, %49 : vector<8x128xi32>
    %c0_i32_15 = arith.constant 0 : i32
    %51 = vector.broadcast %c0_i32_15 : i32 to vector<8x128xi32>
    %52 = arith.cmpi eq, %48, %51 : vector<8x128xi32>
    %53 = arith.andi %50, %52 : vector<8x128xi1>
    %c0_i32_16 = arith.constant 0 : i32
    %54 = vector.broadcast %c0_i32_16 : i32 to vector<8x128xi32>
    %55 = arith.cmpi eq, %47, %54 : vector<8x128xi32>
    %c1_i32_17 = arith.constant 1 : i32
    %56 = vector.broadcast %c1_i32_17 : i32 to vector<8x128xi32>
    %57 = arith.cmpi eq, %48, %56 : vector<8x128xi32>
    %58 = arith.andi %55, %57 : vector<8x128xi1>
    %cst_18 = arith.constant 0.000000e+00 : f32
    %59 = vector.broadcast %46 : f32 to vector<8x128xf32>
    %60 = vector.broadcast %cst_18 : f32 to vector<8x128xf32>
    %61 = arith.select %58, %59, %60 : vector<8x128xi1>, vector<8x128xf32>
    %62 = vector.broadcast %40 : f32 to vector<8x128xf32>
    %63 = arith.select %53, %62, %61 : vector<8x128xi1>, vector<8x128xf32>
    %c0_19 = arith.constant 0 : index
    %c0_20 = arith.constant 0 : index
    %64 = vector.load %arg4[%c0_19, %c0_20] : memref<8x128xf32, #tpu.memory_space<vmem>>, vector<8x128xf32>
    tpu.vector_store %arg4[%c0_19, %c0_20], %63 {strides = array<i32>} : memref<8x128xf32, #tpu.memory_space<vmem>>, vector<8x128xf32>,
    return
  }
  func.func @transform_0(%arg0: i32) -> (i32, i32) {
    %c0_i32 = arith.constant 0 : i32
    %c0_i32_0 = arith.constant 0 : i32
    return %arg0, %c0_i32 : i32, i32
  }
  func.func @transform_1(%arg0: i32) -> (i32, i32) {
    %c0_i32 = arith.constant 0 : i32
    %c0_i32_0 = arith.constant 0 : i32
    return %arg0, %c0_i32 : i32, i32
  }
  func.func @transform_2(%arg0: i32) -> (i32, i32) {
    %c0_i32 = arith.constant 0 : i32
    %c0_i32_0 = arith.constant 0 : i32
    return %arg0, %c0_i32 : i32, i32
  }
  func.func @transform_3(%arg0: i32) -> (i32, i32) {
    %c0_i32 = arith.constant 0 : i32
    %c0_i32_0 = arith.constant 0 : i32
    return %arg0, %c0_i32 : i32, i32
  }
}

</mosaic_0001>

<llo_original>
// kernel: loss_rl_pallas.1
$region0: #{loss_rl_pallas.1}
  #allocation0 [shape = 'u32[]', space=smem, size = 0x4, offset = 0x4, fixed_abs, tag = 'smem constant byte address 0x4 - core index']
  #allocation1 [shape = 'u32[144,128]{1,0:T(1,128)}', space=vmem, size = 0x12000, scoped, tag = 'internal scratch']
  %s0 = inlined_call_operand.vmem [shape: f32[8,16], index: 0, kind: input, shape index: {}]
  %s1 = inlined_call_operand.hbm [shape: s32[8,16], index: 1, kind: input, shape index: {}]
  %s2 = inlined_call_operand.vmem [shape: f32[8,1], index: 2, kind: input, shape index: {}]
  %s3 = inlined_call_operand.vmem [shape: f32[8,128], index: 3, kind: output, shape index: {}]
  %s4 = sld [smem:[#allocation0]]
  $region26: #{loss_rl_pallas.1} parent=0
    _
  %s6 = ssub.s32 1, %s4
  %s7 = scalar_select 0, %s6, %s4
  $region1: #{loss_rl_pallas.1} parent=0
    #allocation2 [shape = 'u8[4096]{0}', space=vmem, size = 0x1000, scoped, tag = 'input window, operand 1, single buffered']
    #allocation3 [shape = 's32[1]{0}', space=sflag, size = 0x4, scoped, tag = 'scoped memory for loss_rl_pallas.1']
    %8 = vsyncpa [#allocation3], 0
    // Predicated region
    $region2: #{loss_rl_pallas.1} parent=1 // pred_check
      _
    $region3: #{loss_rl_pallas.1} parent=1 // pred_check_branch
      %10 = sbr.rel (0) target = $region5
    $region4: #{loss_rl_pallas.1} parent=1 // pred_region
      _
    $region5: #{loss_rl_pallas.1} parent=1 // pred_fallthru
      _
    // Predicated region
    $region6: #{loss_rl_pallas.1} parent=1 // pred_check
      _
    $region7: #{loss_rl_pallas.1} parent=1 // pred_check_branch
      %12 = sbr.rel (0) target = $region9
    $region8: #{loss_rl_pallas.1} parent=1 // pred_region
      %s14 = ssub.s32 128, 128
      %15 = vsyncadd [#allocation3], %s14
      %s17 = sshll.u32 [#allocation2], 4
      %s18 = int_to_ptr.vmem [resolvable:$true] %s17
      %20 = dma.hbm_to_vmem [thread:$0]  %s1, 128, %s18, [#allocation3]
    $region9: #{loss_rl_pallas.1} parent=1 // pred_fallthru
      _
    // Predicated region
    $region10: #{loss_rl_pallas.1} parent=1 // pred_check
      _
    $region11: #{loss_rl_pallas.1} parent=1 // pred_check_branch
      %22 = sbr.rel (0) target = $region13
    $region12: #{loss_rl_pallas.1} parent=1 // pred_region
      _
    $region13: #{loss_rl_pallas.1} parent=1 // pred_fallthru
      _
    // Predicated region
    $region14: #{loss_rl_pallas.1} parent=1 // pred_check
      _
    $region15: #{loss_rl_pallas.1} parent=1 // pred_check_branch
      %24 = sbr.rel (0) target = $region17
    $region16: #{loss_rl_pallas.1} parent=1 // pred_region
      %25 = dma.done [#allocation3], 128
    $region17: #{loss_rl_pallas.1} parent=1 // pred_fallthru
      _
    %v26 = vlaneseq
    %v27 = vand.u32 %v26, 127
    %v28 = vlaneseq
    %v29 = vshrl.u32 %v28, 7
    %s30 = smul.u32 0, 8
    %v31 = vstv %s30
    %v32 = vadd.s32 %v29, %v31
    %v33 = vld [vmem:[#allocation2] sm:$0xff]
    %vm34 = vcmp.eq.s32.totalorder %v33, 1
    %v35 = vsel %vm34, %v27, 16
    %vm36 = vcmask 130048
    %v37 = vsel %vm36, %v35, 2147483647
    %v38 = vand.u32 %v37, 65535
    %v39 = vshra.s32 %v37, 16
    %v40 = vcvt.s32.f32 %v38
    %v41 = vcvt.s32.f32 %v39
    %42 = vmin.xlane.f32.xlu0 %v41
    %v43 = vpop.xlane.xlu0 %42
    %vm44 = vcmp.eq.f32.partialorder %v41, %v43
    %v45 = vsel %vm44, %v40, inf
    %46 = vmin.xlane.f32.xlu0 %v45
    %v47 = vpop.xlane.xlu0 %46
    %v48 = vcvt.f32.s32 %v47
    %v49 = vcvt.f32.s32 %v43
    %v50 = vshll.u32 %v49, 16
    %v51 = vadd.s32 %v50, %v48
    %vm52 = vcmp.le.s32.totalorder %v27, %v51
    %vm53 = vcmp.lt.s32.totalorder %v27, 16
    %vm54 = vcmp.lt.s32.totalorder %v32, 8
    %vm55 = vmand %vm53, %vm54
    %vm56 = vmand %vm52, %vm55
    %v57 = vld [vmem:[%s0] sm:$0xff]
    %v58 = vsub.f32 0.0, %v57
    %v59 = vsel %vm56, %v58, 0.0
    %v60 = vsel %vm36, %v59, 0.0
    %61 = vadd.xlane.f32.xlu0 %v60
    %v62 = vpop.xlane.xlu0 %61
    %v63 = vld [vmem:[%s2] sm:$0xff]
    %v64 = vsel %vm54, %v63, 0.0
    %v65 = vmul.f32 %v62, %v64
    %vm66 = vcmask 7168
    %v67 = vsel %vm66, %v65, 0.0
    %68 = vadd.xlane.f32.xlu0 %v67
    %v69 = vpop.xlane.xlu0 %68
    %v70 = vrot.slane %v69, 4
    %v71 = vadd.f32 %v69, %v70
    %v72 = vrot.slane %v71, 2
    %v73 = vadd.f32 %v71, %v72
    %v74 = vrot.slane %v73, 1
    %v75 = vadd.f32 %v73, %v74
    %s76 = vtos %v75
    %v77 = vsel %vm56, 1, 0
    %v78 = vcvt.s32.f32 %v77
    %v79 = vsel %vm36, %v78, 0.0
    %80 = vadd.xlane.f32.xlu0 %v79
    %v81 = vpop.xlane.xlu0 %80
    %v82 = vrot.slane %v81, 4
    %v83 = vadd.f32 %v81, %v82
    %v84 = vrot.slane %v83, 2
    %v85 = vadd.f32 %v83, %v84
    %v86 = vrot.slane %v85, 1
    %v87 = vadd.f32 %v85, %v86
    %s88 = vtos %v87
    %vm89 = vcmp.eq.s32.totalorder %v29, 0
    %vm90 = vcmp.eq.s32.totalorder %v27, 0
    %vm91 = vmand %vm89, %vm90
    %vm92 = vcmp.eq.s32.totalorder %v27, 1
    %vm93 = vmand %vm89, %vm92
    %v94 = vstv %s88
    %v95 = vsel %vm93, %v94, 0.0
    %v96 = vstv %s76
    %v97 = vsel %vm91, %v96, %v95
    %98 = vst [vmem:[%s3] sm:$0xff] %v97
    // Predicated region
    $region18: #{loss_rl_pallas.1} parent=1 // pred_check
      _
    $region19: #{loss_rl_pallas.1} parent=1 // pred_check_branch
      %100 = sbr.rel (0) target = $region21
    $region20: #{loss_rl_pallas.1} parent=1 // pred_region
      _
    $region21: #{loss_rl_pallas.1} parent=1 // pred_fallthru
      _
    // Predicated region
    $region22: #{loss_rl_pallas.1} parent=1 // pred_check
      _
    $region23: #{loss_rl_pallas.1} parent=1 // pred_check_branch
      %102 = sbr.rel (0) target = $region25
    $region24: #{loss_rl_pallas.1} parent=1 // pred_region
      _
    $region25: #{loss_rl_pallas.1} parent=1 // pred_fallthru
      _
    %103 = vsyncpa [#allocation3], 1

</llo_original>
